<compile_context>
chip_gen: v6e
topology: v6e:2x2x1
jax: 0.10.0
libtpu: 0.0.40
codegen_flags: <defaults>
</compile_context>

<pallas_src>
import functools

import jax
import jax.numpy as jnp
from jax import lax
from jax.experimental import pallas as pl
from jax.experimental.pallas import tpu as pltpu


def _drop_stripes_kernel(bgn_ref, dist_ref, x_ref, o_ref, *, stripes_num, scale):
    """Mask one (1, r_blk, l_blk) tile of the 3-D view of x.

    bgn_ref, dist_ref: SMEM (B*stripes_num,) int32 scalar-prefetch tables.
    x_ref, o_ref:      VMEM (1, r_blk, l_blk) blocks.
    scale:             F for dim=2 (time stripes flattened with freq), 1 for dim=3.
    """
    b = pl.program_id(0)
    li = pl.program_id(2)
    l_blk = x_ref.shape[-1]

    # Global position of every lane of this tile along the flattened lane axis.
    # Mask is only (1, l_blk): per-stripe work is O(l_blk), not O(r_blk*l_blk).
    p = lax.broadcasted_iota(jnp.int32, (1, l_blk), 1) + li * l_blk

    keep = jnp.ones((1, l_blk), dtype=jnp.bool_)
    for s in range(stripes_num):                     # unrolled, stripes_num is tiny
        bgn = bgn_ref[b * stripes_num + s]
        dist = dist_ref[b * stripes_num + s]
        lo = bgn * scale                             # scalar (SMEM) arithmetic only
        hi = (bgn + dist) * scale
        in_stripe = jnp.logical_and(p >= lo, p < hi)
        keep = jnp.logical_and(keep, jnp.logical_not(in_stripe))

    x = x_ref[0]                                     # (r_blk, l_blk)
    # Single broadcasted select at the store; mask math stays in bool/int32.
    o_ref[0] = jnp.where(keep, x, jnp.zeros((), x.dtype))


def _pick_block(extent, unit, max_elems):
    """Largest divisor of `extent` that is a multiple of `unit` and <= max_elems.

    Falls back to the full extent (a full-extent block is always legal)."""
    if extent <= max_elems:
        return extent
    if extent % unit != 0:
        return extent
    cand = (min(max_elems, extent) // unit) * unit
    while cand >= unit:
        if extent % cand == 0:
            return cand
        cand -= unit
    return extent


def drop_stripes(x, key, *, dim, drop_rate, stripes_num, training=True):
    """Functional equivalent of DropStripes.forward (returns a new array).

    x: (batch, channels, time_steps, freq_bins). For true in-place behaviour,
    call under jit with x donated (the output is aliased to x).
    """
    assert x.ndim == 4
    assert dim in (2, 3)

    if (not training) or drop_rate == 0.0:
        return x

    B, C, T, F = x.shape
    total_width = x.shape[dim]
    max_dist = int(total_width * drop_rate)
    assert max_dist > 0, "total_width * drop_rate must be >= 1 (torch.randint high>0)"

    # ---- sampling glue (plain JAX); flat 1-D tables keep SMEM padding tiny ----
    k_dist, k_bgn = jax.random.split(key)
    # distance ~ Uniform{0, ..., max_dist - 1}   (matches torch.randint(0, max_dist))
    distance = jax.random.randint(
        k_dist, (B * stripes_num,), 0, max_dist, dtype=jnp.int32
    )
    # bgn ~ Uniform{0, ..., total_width - distance - 1}
    u = jax.random.uniform(k_bgn, (B * stripes_num,), dtype=jnp.float32)
    bgn = jnp.floor(u * (total_width - distance).astype(jnp.float32)).astype(jnp.int32)

    # ---- lane-dense 3-D view (free reshape, no data movement) ----
    if dim == 2:
        R, Lc, scale = C, T * F, F          # stripes are contiguous lane ranges
    else:
        R, Lc, scale = C * T, F, 1          # freq axis is the lane axis directly
    x_v = x.reshape(B, R, Lc)
    itemsize = jnp.dtype(x.dtype).itemsize

    # ~2 MiB blocks: in+out double buffers (~4x block) stay well inside the
    # scoped VMEM limit on v5e/v6e and on v7x's halved VMEM, while being far
    # past the tile size needed to hit the HBM roofline.
    target_block_bytes = 2 * 1024 * 1024
    l_budget = max(128, target_block_bytes // itemsize)
    l_blk = _pick_block(Lc, 128, l_budget)
    r_budget = max(8, target_block_bytes // (itemsize * l_blk))
    r_blk = _pick_block(R, 8, r_budget)

    grid = (B, R // r_blk, Lc // l_blk)

    kernel = functools.partial(
        _drop_stripes_kernel, stripes_num=stripes_num, scale=scale
    )

    block = pl.BlockSpec((1, r_blk, l_blk), lambda b, ri, li, bgn_t, dist_t: (b, ri, li))

    grid_spec = pltpu.PrefetchScalarGridSpec(
        num_scalar_prefetch=2,      # bgn, distance tables land in SMEM
        grid=grid,
        in_specs=[block],
        out_specs=block,
    )

    out = pl.pallas_call(
        kernel,
        out_shape=jax.ShapeDtypeStruct((B, R, Lc), x.dtype),
        grid_spec=grid_spec,
        # x is operand 2 (after the two scalar-prefetch tables); the op is
        # logically in-place masking, so alias it to the output.
        input_output_aliases={2: 0},
        compiler_params=pltpu.CompilerParams(
            dimension_semantics=("parallel", "parallel", "parallel"),
            vmem_limit_bytes=32 * 1024 * 1024,
        ),
        cost_estimate=pl.CostEstimate(
            flops=x.size,                 # one select per element
            transcendentals=0,
            bytes_accessed=2 * x.size * itemsize,
        ),
    )(bgn, distance, x_v)

    return out.reshape(B, C, T, F)


def _reference_drop_stripes(x, bgn, distance, dim):
    """Pure-JAX reference with the same sampled stripe params (bgn/dist: (B, S))."""
    x = jnp.array(x)
    B = x.shape[0]
    out = x
    for n in range(B):
        for s in range(bgn.shape[1]):
            b0 = int(bgn[n, s])
            d = int(distance[n, s])
            if dim == 2:
                out = out.at[n, :, b0:b0 + d, :].set(0.0)
            else:
                out = out.at[n, :, :, b0:b0 + d].set(0.0)
    return out


if __name__ == "__main__":
    key = jax.random.PRNGKey(0)
    k_x, k_drop = jax.random.split(key)

    # (batch, channels, time_steps, freq_bins)
    B, C, T, F = 2, 4, 16, 16
    x = jax.random.normal(k_x, (B, C, T, F), dtype=jnp.float32)

    drop_rate = 0.5
    stripes_num = 2

    for dim in (2, 3):          # exercise both time and freq stripe dropping
        out = drop_stripes(
            x, k_drop, dim=dim, drop_rate=drop_rate,
            stripes_num=stripes_num, training=True,
        )
        out = jax.block_until_ready(out)

        # Recompute stripe params exactly as the wrapper does and compare.
        total_width = x.shape[dim]
        max_dist = int(total_width * drop_rate)
        k_dist, k_bgn = jax.random.split(k_drop)
        distance = jax.random.randint(
            k_dist, (B * stripes_num,), 0, max_dist, dtype=jnp.int32)
        u = jax.random.uniform(k_bgn, (B * stripes_num,), dtype=jnp.float32)
        bgn = jnp.floor(
            u * (total_width - distance).astype(jnp.float32)).astype(jnp.int32)
        ref = _reference_drop_stripes(
            x, bgn.reshape(B, stripes_num), distance.reshape(B, stripes_num), dim)

        assert out.shape == x.shape and out.dtype == x.dtype
        assert jnp.allclose(out, ref), f"Pallas output mismatch vs reference (dim={dim})"

    # Eval-mode passthrough (no kernel launch).
    out_eval = drop_stripes(
        x, k_drop, dim=2, drop_rate=drop_rate,
        stripes_num=stripes_num, training=False,
    )
    assert jnp.array_equal(out_eval, x)

    print("KERNEL_OK")
</pallas_src>

<mosaic_0001>
module attributes {stable_mosaic.version = 11 : i64} {
  func.func @_drop_stripes_kernel(%arg0: i32, %arg1: i32, %arg2: i32, %arg3: memref<4xi32, #tpu.memory_space<smem>>, %arg4: memref<4xi32, #tpu.memory_space<smem>>, %arg5: memref<1x4x256xf32, #tpu.memory_space<vmem>>, %arg6: memref<1x4x256xf32, #tpu.memory_space<vmem>>) attributes {dimension_semantics = [#tpu.dimension_semantics<parallel>, #tpu.dimension_semantics<parallel>, #tpu.dimension_semantics<parallel>], iteration_bounds = array<i64: 2, 1, 1>, scalar_prefetch = 2 : i64, scratch_operands = 0 : i64, tpu.core_type = #tpu.core_type<tc>, window_params = [{transform_indices = @transform_0, window_bounds = array<i64: 1, 4, 256>}, {transform_indices = @transform_1, window_bounds = array<i64: 1, 4, 256>}]} {
    %0 = tpu.iota {dimensions = array<i32: 1>} : vector<1x256xi32>
    %c256_i32 = arith.constant 256 : i32
    %1 = arith.muli %arg2, %c256_i32 : i32
    %2 = vector.broadcast %1 : i32 to vector<1x256xi32>
    %3 = arith.addi %0, %2 : vector<1x256xi32>
    %true = arith.constant true
    %4 = vector.broadcast %true : i1 to vector<1x256xi1>
    %c2_i32 = arith.constant 2 : i32
    %5 = arith.muli %arg0, %c2_i32 : i32
    %c0_i32 = arith.constant 0 : i32
    %6 = arith.addi %5, %c0_i32 : i32
    %7 = arith.index_cast %6 : i32 to index
    %8 = memref.load %arg3[%7] : memref<4xi32, #tpu.memory_space<smem>>
    %c2_i32_0 = arith.constant 2 : i32
    %9 = arith.muli %arg0, %c2_i32_0 : i32
    %c0_i32_1 = arith.constant 0 : i32
    %10 = arith.addi %9, %c0_i32_1 : i32
    %11 = arith.index_cast %10 : i32 to index
    %12 = memref.load %arg4[%11] : memref<4xi32, #tpu.memory_space<smem>>
    %c16_i32 = arith.constant 16 : i32
    %13 = arith.muli %8, %c16_i32 : i32
    %14 = arith.addi %8, %12 : i32
    %c16_i32_2 = arith.constant 16 : i32
    %15 = arith.muli %14, %c16_i32_2 : i32
    %16 = vector.broadcast %13 : i32 to vector<1x256xi32>
    %17 = arith.cmpi sge, %3, %16 : vector<1x256xi32>
    %18 = vector.broadcast %15 : i32 to vector<1x256xi32>
    %19 = arith.cmpi slt, %3, %18 : vector<1x256xi32>
    %20 = arith.andi %17, %19 : vector<1x256xi1>
    %cst = arith.constant dense<true> : vector<1x256xi1>
    %21 = arith.xori %20, %cst : vector<1x256xi1>
    %22 = arith.andi %4, %21 : vector<1x256xi1>
    %c2_i32_3 = arith.constant 2 : i32
    %23 = arith.muli %arg0, %c2_i32_3 : i32
    %c1_i32 = arith.constant 1 : i32
    %24 = arith.addi %23, %c1_i32 : i32
    %25 = arith.index_cast %24 : i32 to index
    %26 = memref.load %arg3[%25] : memref<4xi32, #tpu.memory_space<smem>>
    %c2_i32_4 = arith.constant 2 : i32
    %27 = arith.muli %arg0, %c2_i32_4 : i32
    %c1_i32_5 = arith.constant 1 : i32
    %28 = arith.addi %27, %c1_i32_5 : i32
    %29 = arith.index_cast %28 : i32 to index
    %30 = memref.load %arg4[%29] : memref<4xi32, #tpu.memory_space<smem>>
    %c16_i32_6 = arith.constant 16 : i32
    %31 = arith.muli %26, %c16_i32_6 : i32
    %32 = arith.addi %26, %30 : i32
    %c16_i32_7 = arith.constant 16 : i32
    %33 = arith.muli %32, %c16_i32_7 : i32
    %34 = vector.broadcast %31 : i32 to vector<1x256xi32>
    %35 = arith.cmpi sge, %3, %34 : vector<1x256xi32>
    %36 = vector.broadcast %33 : i32 to vector<1x256xi32>
    %37 = arith.cmpi slt, %3, %36 : vector<1x256xi32>
    %38 = arith.andi %35, %37 : vector<1x256xi1>
    %cst_8 = arith.constant dense<true> : vector<1x256xi1>
    %39 = arith.xori %38, %cst_8 : vector<1x256xi1>
    %40 = arith.andi %22, %39 : vector<1x256xi1>
    %c0 = arith.constant 0 : index
    %c0_9 = arith.constant 0 : index
    %c0_10 = arith.constant 0 : index
    %41 = vector.load %arg5[%c0, %c0_9, %c0_10] : memref<1x4x256xf32, #tpu.memory_space<vmem>>, vector<1x4x256xf32>
    %42 = vector.shape_cast %41 : vector<1x4x256xf32> to vector<4x256xf32>
    %cst_11 = arith.constant 0.000000e+00 : f32
    %43 = vector.shape_cast %40 : vector<1x256xi1> to vector<1x256xi1>
    %44 = vector.broadcast %43 : vector<1x256xi1> to vector<4x256xi1>
    %45 = vector.broadcast %cst_11 : f32 to vector<4x256xf32>
    %46 = arith.select %44, %42, %45 : vector<4x256xi1>, vector<4x256xf32>
    %c0_12 = arith.constant 0 : index
    %c0_13 = arith.constant 0 : index
    %c0_14 = arith.constant 0 : index
    %47 = vector.load %arg6[%c0_12, %c0_13, %c0_14] : memref<1x4x256xf32, #tpu.memory_space<vmem>>, vector<1x4x256xf32>
    %48 = vector.shape_cast %47 : vector<1x4x256xf32> to vector<4x256xf32>
    %49 = vector.shape_cast %46 : vector<4x256xf32> to vector<1x4x256xf32>
    tpu.vector_store %arg6[%c0_12, %c0_13, %c0_14], %49 {strides = array<i32>} : memref<1x4x256xf32, #tpu.memory_space<vmem>>, vector<1x4x256xf32>,
    return
  }
  func.func @transform_0(%arg0: i32, %arg1: i32, %arg2: i32, %arg3: memref<4xi32, #tpu.memory_space<smem>>, %arg4: memref<4xi32, #tpu.memory_space<smem>>) -> (i32, i32, i32) {
    %c0_i32 = arith.constant 0 : i32
    return %arg0, %arg1, %arg2 : i32, i32, i32
  }
  func.func @transform_1(%arg0: i32, %arg1: i32, %arg2: i32, %arg3: memref<4xi32, #tpu.memory_space<smem>>, %arg4: memref<4xi32, #tpu.memory_space<smem>>) -> (i32, i32, i32) {
    %c0_i32 = arith.constant 0 : i32
    return %arg0, %arg1, %arg2 : i32, i32, i32
  }
}

</mosaic_0001>

<llo_original>
// kernel: tpu_custom_call.1
$region0: #{tpu_custom_call.1}
  #allocation0 [shape = 'u32[]', space=smem, size = 0x4, offset = 0x4, fixed_abs, tag = 'smem constant byte address 0x4 - core index']
  #allocation1 [shape = 'u32[144,128]{1,0:T(1,128)}', space=vmem, size = 0x12000, scoped, tag = 'internal scratch']
  #allocation2 [shape = 's32[1]{0}', space=sflag, size = 0x4, scoped, tag = 'scoped memory for tpu_custom_call.1']
  #allocation3 [shape = 'u8[512]{0}', space=smem, size = 0x200, scoped, tag = 'prefetched SMEM operand 0']
  #allocation4 [shape = 'u8[512]{0}', space=smem, size = 0x200, scoped, tag = 'prefetched SMEM operand 1']
  %s0 = inlined_call_operand.vmem [shape: s32[4], index: 0, kind: input, shape index: {}]
  %s1 = inlined_call_operand.vmem [shape: s32[4], index: 1, kind: input, shape index: {}]
  %s2 = inlined_call_operand.hbm [shape: f32[2,4,256], index: 2, kind: input, shape index: {}, may-alias: {2,3}]
  %s3 = inlined_call_operand.hbm [shape: f32[2,4,256], index: 3, kind: output, shape index: {}, may-alias: {2,3}]
  %s4 = sld [smem:[#allocation0]]
  $region41: #{tpu_custom_call.1} parent=0
    _
  %s6 = ssub.s32 1, %s4
  %s7 = scalar_select 0, %s6, %s4
  %s8 = sshll.u32 %s0, 4
  %s9 = int_to_ptr.vmem [resolvable:$true] %s8
  %11 = dma.vmem_to_smem %s9, 16, [#allocation3], [#allocation2]
  %s12 = sshll.u32 %s1, 4
  %s13 = int_to_ptr.vmem [resolvable:$true] %s12
  %15 = dma.vmem_to_smem %s13, 16, [#allocation4], [#allocation2]
  %16 = dma.done [#allocation2], 32
  %17 = sfence
  $region1: #{tpu_custom_call.1} parent=0
    #allocation5 [shape = 'u8[8192]{0}', space=vmem, size = 0x2000, scoped, tag = 'input window, operand 2']
    #allocation6 [shape = 's32[2]{0}', space=sflag, size = 0x8, scoped, tag = 'scoped memory for tpu_custom_call.1']
    #allocation7 [shape = 's32[2]{0}', space=sflag, size = 0x8, scoped, tag = 'scoped memory for tpu_custom_call.1']
    #allocation8 [shape = 'u8[8192]{0}', space=vmem, size = 0x2000, scoped, tag = 'output window, operand 0']
    %18 = vsyncpa [#allocation6], 0
    %s19 = scalar_lea.sflag [#allocation6], 1
    %20 = vsyncpa %s19, 0
    %21 = vsyncpa [#allocation7], 0
    %s22 = scalar_lea.sflag [#allocation7], 1
    %23 = vsyncpa %s22, 0
    loop: start=0, step=1, limit=4
    $region2: #{tpu_custom_call.1} parent=1 // loop_pre_header
      _
    $region3: #{tpu_custom_call.1} parent=1 // loop_header
      %s25 = sphi 0, %s29
      %p26 = scmp.ge.s32.totalorder %s25, 4
      %s32 = sphi 0, %s51
      %s33 = sphi 0, %s47
      %s34 = sphi 0, %s43
      %s35 = sphi 0, %s32
      %s36 = sphi 0, %s33
      %s37 = sphi 0, %s34
      %s38 = sphi 0, %s35
      %s39 = sphi 0, %s36
      %s40 = sphi 0, %s37
      %s58 = sphi 0, %s60
      %s61 = sphi 0, %s58
      %s62 = sphi 0, %s61
      %s78 = sphi 0, %s62
      %s88 = sphi 0, %s90
      %s91 = sphi 0, %s88
      %s92 = sphi 0, %s91
      %s108 = sphi 0, %s92
    $region4: #{tpu_custom_call.1} parent=1 // loop_header_branch
      %28 = sbr.rel (%p26) target = $region8
    $region5: #{tpu_custom_call.1} parent=1 // loop_body
      %s30 = ssub.s32 %s25, 1
      %s31 = ssub.s32 %s25, 2
      %s41 = sadd.s32 1, %s34
      %p42 = scmp.ge.s32.totalorder %s41, 1
      %s43 = scalar_select %p42, 0, %s41
      %s44 = sadd.s32 1, %s33
      %s45 = scalar_select %p42, %s44, %s33
      %p46 = scmp.ge.s32.totalorder %s45, 1
      %s47 = scalar_select %p46, 0, %s45
      %s48 = sadd.s32 1, %s32
      %s49 = scalar_select %p46, %s48, %s32
      %p50 = scmp.ge.s32.totalorder %s49, 2
      %s51 = scalar_select %p50, 0, %s49
      %s52 = ssub.s32 %s32, %s51
      %s53 = ssub.s32 %s33, %s47
      %s54 = sor.u32 %s52, %s53
      %s55 = ssub.s32 %s34, %s43
      %s56 = sor.u32 %s54, %s55
      %p57 = scmp.eq.s32.totalorder %s56, 0
      %s59 = sadd.s32 %s58, 1
      %s60 = scalar_select %p57, %s58, %s59
      %p63 = pneg %p57
      %p64 = scmp.eq.s32.totalorder %s25, 1
      %p65 = por %p63, %p64
      %p66 = scmp.ne.s32.totalorder %s58, %s61
      %p67 = scmp.eq.s32.totalorder %s25, 0
      %p68 = por %p66, %p67
      %p69 = scmp.ne.s32.totalorder %s58, %s61
      %p70 = scmp.eq.s32.totalorder %s30, 1
      %p71 = por %p69, %p70
      %p72 = scmp.ne.s32.totalorder %s61, %s62
      %p73 = scmp.eq.s32.totalorder %s30, 0
      %p74 = por %p72, %p73
      %p75 = scmp.ne.s32.totalorder %s61, %s62
      %p76 = scmp.eq.s32.totalorder %s31, 1
      %p77 = por %p75, %p76
      %p79 = scmp.ne.s32.totalorder %s62, %s78
      %p80 = scmp.eq.s32.totalorder %s31, 0
      %p81 = por %p79, %p80
      %s82 = ssub.s32 %s32, %s51
      %s83 = ssub.s32 %s33, %s47
      %s84 = sor.u32 %s82, %s83
      %s85 = ssub.s32 %s34, %s43
      %s86 = sor.u32 %s84, %s85
      %p87 = scmp.eq.s32.totalorder %s86, 0
      %s89 = sadd.s32 %s88, 1
      %s90 = scalar_select %p87, %s88, %s89
      %p93 = pneg %p87
      %p94 = scmp.eq.s32.totalorder %s25, 1
      %p95 = por %p93, %p94
      %p96 = scmp.ne.s32.totalorder %s88, %s91
      %p97 = scmp.eq.s32.totalorder %s25, 0
      %p98 = por %p96, %p97
      %p99 = scmp.ne.s32.totalorder %s88, %s91
      %p100 = scmp.eq.s32.totalorder %s30, 1
      %p101 = por %p99, %p100
      %p102 = scmp.ne.s32.totalorder %s91, %s92
      %p103 = scmp.eq.s32.totalorder %s30, 0
      %p104 = por %p102, %p103
      %p105 = scmp.ne.s32.totalorder %s91, %s92
      %p106 = scmp.eq.s32.totalorder %s31, 1
      %p107 = por %p105, %p106
      %p109 = scmp.ne.s32.totalorder %s92, %s108
      %p110 = scmp.eq.s32.totalorder %s31, 0
      %p111 = por %p109, %p110
      %p112 = scmp.le.s32.totalorder 1, %s25
      %p113 = scmp.lt.s32.totalorder %s25, 3
      %p114 = pnand %p112, %p113
      %p115 = pneg %p114
      // Predicated region
      $region9: #{tpu_custom_call.1} parent=5 // pred_check
        _
      $region10: #{tpu_custom_call.1} parent=5 // pred_check_branch
        %117 = sbr.rel (%p114) target = $region12
      $region11: #{tpu_custom_call.1} parent=5 // pred_region
        %s118 = ssub.s32 %s25, 1
      $region12: #{tpu_custom_call.1} parent=5 // pred_fallthru
        _
      %p119 = scmp.lt.s32.totalorder %s25, 2
      // Predicated region
      $region13: #{tpu_custom_call.1} parent=5 // pred_check
        %p120 = pneg %p119
      $region14: #{tpu_custom_call.1} parent=5 // pred_check_branch
        %122 = sbr.rel (%p120) target = $region16
      $region15: #{tpu_custom_call.1} parent=5 // pred_region
        // Predicated region
        $region17: #{tpu_custom_call.1} parent=15 // pred_check
          %p123 = pneg %p68
        $region18: #{tpu_custom_call.1} parent=15 // pred_check_branch
          %125 = sbr.rel (%p123) target = $region20
        $region19: #{tpu_custom_call.1} parent=15 // pred_region
          %s126 = sand.u32 %s58, 1
          %s127 = scalar_lea.sflag [#allocation6], %s126
          %s128 = sand.u32 %s58, 1
          %s129 = smul.addr %s128, 8
          %s130 = scalar_lea.vmem [#allocation5], %s129
          %s131 = smul.u32 2, %s34
          %s133 = ssub.s32 128, 128
          %134 = vsyncadd %s127, %s133
          %s135 = smul.addr %s33, 2
          %s136 = sadd.s32 %s131, %s135
          %s137 = smul.addr %s32, 2
          %s138 = sadd.s32 %s136, %s137
          %s139 = smul.addr %s138, 64
          %s140 = scalar_lea.hbm %s2, %s139
          %s142 = sshll.u32 %s130, 4
          %s143 = int_to_ptr.vmem [resolvable:$true] %s142
          %145 = dma.hbm_to_vmem [thread:$0]  %s140, 128, %s143, %s127
        $region20: #{tpu_custom_call.1} parent=15 // pred_fallthru
          _
      $region16: #{tpu_custom_call.1} parent=5 // pred_fallthru
        _
      %p146 = scmp.le.s32.totalorder 1, %s25
      %p147 = scmp.lt.s32.totalorder %s25, 3
      %p148 = pnand %p146, %p147
      %p149 = pneg %p148
      // Predicated region
      $region21: #{tpu_custom_call.1} parent=5 // pred_check
        _
      $region22: #{tpu_custom_call.1} parent=5 // pred_check_branch
        %151 = sbr.rel (%p148) target = $region24
      $region23: #{tpu_custom_call.1} parent=5 // pred_region
        %s152 = ssub.s32 %s25, 1
        %s153 = sand.u32 %s61, 1
        %s154 = scalar_lea.sflag [#allocation6], %s153
        %s155 = sand.u32 %s61, 1
        %s156 = smul.addr %s155, 8
        %s157 = scalar_lea.vmem [#allocation5], %s156
        // Predicated region
        $region25: #{tpu_custom_call.1} parent=23 // pred_check
          %p158 = pneg %p74
        $region26: #{tpu_custom_call.1} parent=23 // pred_check_branch
          %160 = sbr.rel (%p158) target = $region28
        $region27: #{tpu_custom_call.1} parent=23 // pred_region
          %161 = dma.done %s154, 128
        $region28: #{tpu_custom_call.1} parent=23 // pred_fallthru
          _
        %s162 = sand.u32 %s61, 1
        %s163 = scalar_lea.sflag [#allocation6], %s162
        %s164 = sand.u32 %s61, 1
        %s165 = smul.addr %s164, 8
        %s166 = scalar_lea.vmem [#allocation5], %s165
        %p167 = pneg %p74
        %p168 = pneg %p71
        %p169 = pneg %p104
        %p170 = pneg %p101
        %s171 = sand.u32 %s91, 1
        %s172 = scalar_lea.sflag [#allocation7], %s171
        %s173 = sand.u32 %s91, 1
        %s174 = smul.addr %s173, 8
        %s175 = scalar_lea.vmem [#allocation8], %s174
        %s176 = smul.u32 2, %s37
        %s177 = smul.u32 2, %s37
        %v178 = vlaneseq
        %v179 = vand.u32 %v178, 127
        %v180 = vadd.s32 %v179, 128
        %s181 = smul.u32 %s37, 256
        %v182 = vstv %s181
        %v183 = vadd.s32 %v179, %v182
        %v184 = vadd.s32 %v180, %v182
        %s185 = smul.u32 %s35, 2
        %s186 = sld [smem:[#allocation3 + %s185]]
        %s187 = sld [smem:[#allocation4 + %s185]]
        %s188 = smul.u32 %s186, 16
        %s189 = sadd.s32 %s186, %s187
        %s190 = smul.u32 %s189, 16
        %v191 = vstv %s188
        %vm192 = vcmp.ge.s32.totalorder %v183, %v191
        %vm193 = vcmp.ge.s32.totalorder %v184, %v191
        %v194 = vstv %s190
        %vm195 = vcmp.lt.s32.totalorder %v183, %v194
        %vm196 = vcmp.lt.s32.totalorder %v184, %v194
        %vm197 = vmand %vm192, %vm195
        %vm198 = vmand %vm193, %vm196
        %vm199 = vmxor %vm197, 1
        %vm200 = vmxor %vm198, 1
        %s201 = sadd.s32 %s185, 1
        %s202 = sld [smem:[#allocation3 + %s201]]
        %s203 = sld [smem:[#allocation4 + %s201]]
        %s204 = smul.u32 %s202, 16
        %s205 = sadd.s32 %s202, %s203
        %s206 = smul.u32 %s205, 16
        %v207 = vstv %s204
        %vm208 = vcmp.ge.s32.totalorder %v183, %v207
        %vm209 = vcmp.ge.s32.totalorder %v184, %v207
        %v210 = vstv %s206
        %vm211 = vcmp.lt.s32.totalorder %v183, %v210
        %vm212 = vcmp.lt.s32.totalorder %v184, %v210
        %vm213 = vmand %vm208, %vm211
        %vm214 = vmand %vm209, %vm212
        %vm215 = vmxor %vm213, 1
        %vm216 = vmxor %vm214, 1
        %vm217 = vmand %vm199, %vm215
        %vm218 = vmand %vm200, %vm216
        %v219 = vld [vmem:[%s157] sm:$0xff]
        %v220 = vsel %vm217, 1, 0
        %v221 = vsel %vm218, 1, 0
        %vm222 = vcmp.eq.s32.totalorder %v220, 1
        %vm223 = vcmp.eq.s32.totalorder %v221, 1
        %v225 = vcombine.high %v219, %v219
        %v227 = vsel %vm222, %v219, 0.0
        %v228 = vsel %vm223, %v225, 0.0
        %v231 = vcombine.low %v227, %v228
        %233 = vst [vmem:[%s175] sm:$0xff] %v231
        %s234 = sand.u32 %s91, 1
        %s235 = scalar_lea.sflag [#allocation7], %s234
        %s236 = sand.u32 %s91, 1
        %s237 = smul.addr %s236, 8
        %s238 = scalar_lea.vmem [#allocation8], %s237
        // Predicated region
        $region29: #{tpu_custom_call.1} parent=23 // pred_check
          %p239 = pneg %p101
        $region30: #{tpu_custom_call.1} parent=23 // pred_check_branch
          %241 = sbr.rel (%p239) target = $region32
        $region31: #{tpu_custom_call.1} parent=23 // pred_region
          %s242 = smul.u32 2, %s37
          %s244 = ssub.s32 128, 128
          %245 = vsyncadd %s235, %s244
          %s246 = smul.addr %s36, 2
          %s247 = sadd.s32 %s242, %s246
          %s248 = smul.addr %s35, 2
          %s249 = sadd.s32 %s247, %s248
          %s250 = smul.addr %s249, 64
          %s251 = scalar_lea.hbm %s3, %s250
          %s253 = sshll.u32 %s238, 4
          %s254 = int_to_ptr.vmem [resolvable:$true] %s253
          %256 = dma.vmem_to_hbm [thread:$0]  %s254, 128, %s251, %s235
        $region32: #{tpu_custom_call.1} parent=23 // pred_fallthru
          _
      $region24: #{tpu_custom_call.1} parent=5 // pred_fallthru
        _
      %p257 = scmp.le.s32.totalorder 2, %s25
      // Predicated region
      $region33: #{tpu_custom_call.1} parent=5 // pred_check
        %p258 = pneg %p257
      $region34: #{tpu_custom_call.1} parent=5 // pred_check_branch
        %260 = sbr.rel (%p258) target = $region36
      $region35: #{tpu_custom_call.1} parent=5 // pred_region
        %s261 = ssub.s32 %s25, 2
        // Predicated region
        $region37: #{tpu_custom_call.1} parent=35 // pred_check
          %p262 = pneg %p107
        $region38: #{tpu_custom_call.1} parent=35 // pred_check_branch
          %264 = sbr.rel (%p262) target = $region40
        $region39: #{tpu_custom_call.1} parent=35 // pred_region
          %s265 = sand.u32 %s92, 1
          %s266 = scalar_lea.sflag [#allocation7], %s265
          %s267 = sand.u32 %s92, 1
          %s268 = smul.addr %s267, 8
          %s269 = scalar_lea.vmem [#allocation8], %s268
          %270 = dma.done %s266, 128
        $region40: #{tpu_custom_call.1} parent=35 // pred_fallthru
          _
      $region36: #{tpu_custom_call.1} parent=5 // pred_fallthru
        _
    $region6: #{tpu_custom_call.1} parent=1 // loop_footer
      %s29 = sadd.s32 1, %s25
    $region7: #{tpu_custom_call.1} parent=1 // loop_footer_branch
      %24 = sbr.rel target = $region3
    $region8: #{tpu_custom_call.1} parent=1 // loop_exit
      _
    %271 = vsyncpa [#allocation6], 1
    %s272 = scalar_lea.sflag [#allocation6], 1
    %273 = vsyncpa %s272, 1
    %274 = vsyncpa [#allocation7], 1
    %s275 = scalar_lea.sflag [#allocation7], 1
    %276 = vsyncpa %s275, 1

</llo_original>
